<compile_context>
chip_gen: v5e
topology: v5e:2x2
jax: 0.10.0
libtpu: 0.0.40
codegen_flags: <defaults>
</compile_context>

<pallas_src>
import functools

import jax
import jax.numpy as jnp
from jax.experimental import pallas as pl
from jax.experimental.pallas import tpu as pltpu


def _leaky_relu(x, slope=0.01):
    # torch.nn.functional.leaky_relu default negative_slope = 0.01
    return jnp.where(x >= 0, x, slope * x)


def _round_up(n, m):
    return (n + m - 1) // m * m


# ----------------------------------------------------------------------------
# Kernel
# ----------------------------------------------------------------------------
def regression_kernel(x_ref, w1_ref, b1_ref, wh_ref, bh_ref, out_ref):
    # In-kernel f32 -> bf16 cast of the x tile (VPU work, hidden under DMA/MXU).
    x_bf = x_ref[...].astype(jnp.bfloat16)

    # fc = leaky_relu(x @ W1 + b1): bf16 MXU matmul, f32 accumulation/activation.
    fc = jnp.dot(x_bf, w1_ref[...], preferred_element_type=jnp.float32)
    fc = _leaky_relu(fc + b1_ref[...])

    # Fused density+count head: one matmul over 128 padded output lanes,
    # one lane-dense unmasked store.
    heads = jnp.dot(fc.astype(jnp.bfloat16), wh_ref[...],
                    preferred_element_type=jnp.float32)
    out_ref[...] = _leaky_relu(heads + bh_ref[...]).astype(out_ref.dtype)


# ----------------------------------------------------------------------------
# pallas_call wrapper
# ----------------------------------------------------------------------------
@functools.partial(jax.jit, static_argnames=("tile_b",))
def _regression_padded(x_f32, w1p, b1p, whp, bhp, *, tile_b):
    b_pad, in_features = x_f32.shape
    hid_pad = w1p.shape[1]
    head_pad = whp.shape[1]
    grid = (b_pad // tile_b,)

    resident = lambda i: (0, 0)   # constant index_map -> weights stay VMEM-resident
    return pl.pallas_call(
        regression_kernel,
        out_shape=jax.ShapeDtypeStruct((b_pad, head_pad), jnp.bfloat16),
        grid=grid,
        in_specs=[
            pl.BlockSpec((tile_b, in_features), lambda i: (i, 0)),   # x (pipelined, f32)
            pl.BlockSpec((in_features, hid_pad), resident),          # W1   (bf16)
            pl.BlockSpec((1, hid_pad), resident),                    # b1   (f32)
            pl.BlockSpec((hid_pad, head_pad), resident),             # fused head weight (bf16)
            pl.BlockSpec((1, head_pad), resident),                   # fused head bias   (f32)
        ],
        out_specs=pl.BlockSpec((tile_b, head_pad), lambda i: (i, 0)),
        compiler_params=pltpu.CompilerParams(
            dimension_semantics=("parallel",),      # batch steps shard across TCs
            vmem_limit_bytes=24 << 20,              # ~10 MiB footprint + headroom
        ),
    )(x_f32, w1p, b1p, whp, bhp)


# ----------------------------------------------------------------------------
# One-time parameter preparation (hoisted out of the per-call hot path)
# ----------------------------------------------------------------------------
def prepare_params(w1, b1, wd, bd, wc, bc):
    """Pad / fuse / cast the module weights once. Weights stored (in, out)."""
    hidden = w1.shape[1]
    density_dim = wd.shape[1]
    head_dim = density_dim + 1

    hid_pad = _round_up(hidden, 128)        # 1000 -> 1024
    head_pad = _round_up(head_dim, 128)     # 17   -> 128

    w1p = jnp.pad(w1, ((0, 0), (0, hid_pad - hidden))).astype(jnp.bfloat16)
    b1p = jnp.pad(jnp.reshape(b1, (1, -1)),
                  ((0, 0), (0, hid_pad - hidden))).astype(jnp.float32)

    wh = jnp.concatenate([wd, wc], axis=1)                          # (hidden, 17)
    whp = jnp.pad(wh, ((0, hid_pad - hidden),
                       (0, head_pad - head_dim))).astype(jnp.bfloat16)
    bh = jnp.concatenate([jnp.reshape(bd, (1, -1)),
                          jnp.reshape(bc, (1, -1))], axis=1)        # (1, 17)
    bhp = jnp.pad(bh, ((0, 0), (0, head_pad - head_dim))).astype(jnp.float32)

    return {"w1p": w1p, "b1p": b1p, "whp": whp, "bhp": bhp,
            "density_dim": density_dim}


# ----------------------------------------------------------------------------
# Batch tiling: large per-step work, but always >= 2 grid steps (v7x 2 TCs)
# ----------------------------------------------------------------------------
_TARGET_TILE_B = 1024


def _choose_batch_tiling(B):
    tile = _TARGET_TILE_B
    while tile > 8 and _round_up(B, tile) // tile < 2:
        tile //= 2
    b_pad = max(_round_up(B, tile), 2 * tile)   # guarantee >= 2 grid steps
    return tile, b_pad


# ----------------------------------------------------------------------------
# Forward pass
# ----------------------------------------------------------------------------
def regression_forward(x, params):
    """x: (B, in_features) float32. Returns (density, count) in float32."""
    B = x.shape[0]
    tile_b, b_pad = _choose_batch_tiling(B)
    x_p = jnp.pad(x, ((0, b_pad - B), (0, 0)))        # pad batch only; cast in kernel

    out = _regression_padded(x_p, params["w1p"], params["b1p"],
                             params["whp"], params["bhp"], tile_b=tile_b)

    d = params["density_dim"]
    density = out[:B, :d].astype(jnp.float32)
    count = out[:B, d:d + 1].astype(jnp.float32)
    return density, count


def regression_module(x, w1, b1, wd, bd, wc, bc):
    """Convenience one-shot wrapper (prepares params on every call)."""
    return regression_forward(x, prepare_params(w1, b1, wd, bd, wc, bc))


def _ref_forward(x, w1, b1, wd, bd, wc, bc):
    fc = _leaky_relu(x @ w1 + b1)
    return _leaky_relu(fc @ wd + bd), _leaky_relu(fc @ wc + bc)


if __name__ == "__main__":
    # Small shapes consistent with the module.
    batch = 8
    in_features = 64
    hidden = 1000                 # fixed by the module (Linear(in_features, 1000))
    label_patch_size = 4          # density output = label_patch_size ** 2 = 16

    key = jax.random.PRNGKey(0)
    kx, k1, kb1, kd, kbd, kc, kbc = jax.random.split(key, 7)

    x = jax.random.normal(kx, (batch, in_features), dtype=jnp.float32)

    # Deterministic synthetic parameters (stored (in, out)); biases 2D (1, out).
    w1 = 0.02 * jax.random.normal(k1, (in_features, hidden), dtype=jnp.float32)
    b1 = 0.02 * jax.random.normal(kb1, (1, hidden), dtype=jnp.float32)
    wd = 0.02 * jax.random.normal(kd, (hidden, label_patch_size ** 2), dtype=jnp.float32)
    bd = 0.02 * jax.random.normal(kbd, (1, label_patch_size ** 2), dtype=jnp.float32)
    wc = 0.02 * jax.random.normal(kc, (hidden, 1), dtype=jnp.float32)
    bc = 0.02 * jax.random.normal(kbc, (1, 1), dtype=jnp.float32)

    # Hoisted, one-time weight prep (pad + fuse heads + bf16 cast).
    params = prepare_params(w1, b1, wd, bd, wc, bc)

    density, count = jax.block_until_ready(regression_forward(x, params))

    # Sanity check against a plain-JAX f32 reference (kernel matmuls are bf16,
    # f32 accumulation; output slab is bf16 -> bf16-appropriate tolerance).
    ref_density, ref_count = _ref_forward(x, w1, b1, wd, bd, wc, bc)
    assert density.shape == (batch, label_patch_size ** 2)
    assert count.shape == (batch, 1)
    assert jnp.allclose(density, ref_density, atol=2e-2, rtol=2e-2)
    assert jnp.allclose(count, ref_count, atol=2e-2, rtol=2e-2)

    print("KERNEL_OK")
</pallas_src>

<mosaic_0001>
module attributes {stable_mosaic.version = 11 : i64} {
  func.func @regression_kernel(%arg0: i32, %arg1: memref<8x64xf32, #tpu.memory_space<vmem>>, %arg2: memref<64x1024xbf16, #tpu.memory_space<vmem>>, %arg3: memref<1x1024xf32, #tpu.memory_space<vmem>>, %arg4: memref<1024x128xbf16, #tpu.memory_space<vmem>>, %arg5: memref<1x128xf32, #tpu.memory_space<vmem>>, %arg6: memref<8x128xbf16, #tpu.memory_space<vmem>>) attributes {dimension_semantics = [#tpu.dimension_semantics<parallel>], iteration_bounds = array<i64: 2>, scalar_prefetch = 0 : i64, scratch_operands = 0 : i64, tpu.core_type = #tpu.core_type<tc>, window_params = [{transform_indices = @transform_0, window_bounds = array<i64: 8, 64>}, {pipeline_mode = #tpu.pipeline_mode<synchronous>, transform_indices = @transform_1, window_bounds = array<i64: 64, 1024>}, {pipeline_mode = #tpu.pipeline_mode<synchronous>, transform_indices = @transform_2, window_bounds = array<i64: 1, 1024>}, {pipeline_mode = #tpu.pipeline_mode<synchronous>, transform_indices = @transform_3, window_bounds = array<i64: 1024, 128>}, {pipeline_mode = #tpu.pipeline_mode<synchronous>, transform_indices = @transform_4, window_bounds = array<i64: 1, 128>}, {transform_indices = @transform_5, window_bounds = array<i64: 8, 128>}]} {
    %c0 = arith.constant 0 : index
    %c0_0 = arith.constant 0 : index
    %0 = vector.load %arg1[%c0, %c0_0] : memref<8x64xf32, #tpu.memory_space<vmem>>, vector<8x64xf32>
    %1 = arith.truncf %0 : vector<8x64xf32> to vector<8x64xbf16>
    %c0_1 = arith.constant 0 : index
    %c0_2 = arith.constant 0 : index
    %2 = vector.load %arg2[%c0_1, %c0_2] : memref<64x1024xbf16, #tpu.memory_space<vmem>>, vector<64x1024xbf16>
    %cst = arith.constant dense<0.000000e+00> : vector<8x1024xf32>
    %3 = tpu.matmul %1, %2, %cst {dimension_numbers = #tpu.dot_dimension_numbers<[1], [0], [0], [1], [0, 0, 1, 1], [], []>} : vector<8x64xbf16>, vector<64x1024xbf16>, vector<8x1024xf32> -> vector<8x1024xf32>
    %c0_3 = arith.constant 0 : index
    %c0_4 = arith.constant 0 : index
    %4 = vector.load %arg3[%c0_3, %c0_4] : memref<1x1024xf32, #tpu.memory_space<vmem>>, vector<1x1024xf32>
    %5 = vector.broadcast %4 : vector<1x1024xf32> to vector<8x1024xf32>
    %6 = arith.addf %3, %5 : vector<8x1024xf32>
    %cst_5 = arith.constant 0.000000e+00 : f32
    %7 = vector.broadcast %cst_5 : f32 to vector<8x1024xf32>
    %8 = arith.cmpf oge, %6, %7 : vector<8x1024xf32>
    %cst_6 = arith.constant 0.00999999977 : f32
    %9 = vector.broadcast %cst_6 : f32 to vector<8x1024xf32>
    %10 = arith.mulf %9, %6 : vector<8x1024xf32>
    %11 = arith.select %8, %6, %10 : vector<8x1024xi1>, vector<8x1024xf32>
    %12 = arith.truncf %11 : vector<8x1024xf32> to vector<8x1024xbf16>
    %c0_7 = arith.constant 0 : index
    %c0_8 = arith.constant 0 : index
    %13 = vector.load %arg4[%c0_7, %c0_8] : memref<1024x128xbf16, #tpu.memory_space<vmem>>, vector<1024x128xbf16>
    %cst_9 = arith.constant dense<0.000000e+00> : vector<8x128xf32>
    %14 = tpu.matmul %12, %13, %cst_9 {dimension_numbers = #tpu.dot_dimension_numbers<[1], [0], [0], [1], [0, 0, 1, 1], [], []>} : vector<8x1024xbf16>, vector<1024x128xbf16>, vector<8x128xf32> -> vector<8x128xf32>
    %c0_10 = arith.constant 0 : index
    %c0_11 = arith.constant 0 : index
    %15 = vector.load %arg5[%c0_10, %c0_11] : memref<1x128xf32, #tpu.memory_space<vmem>>, vector<1x128xf32>
    %16 = vector.broadcast %15 : vector<1x128xf32> to vector<8x128xf32>
    %17 = arith.addf %14, %16 : vector<8x128xf32>
    %cst_12 = arith.constant 0.000000e+00 : f32
    %18 = vector.broadcast %cst_12 : f32 to vector<8x128xf32>
    %19 = arith.cmpf oge, %17, %18 : vector<8x128xf32>
    %cst_13 = arith.constant 0.00999999977 : f32
    %20 = vector.broadcast %cst_13 : f32 to vector<8x128xf32>
    %21 = arith.mulf %20, %17 : vector<8x128xf32>
    %22 = arith.select %19, %17, %21 : vector<8x128xi1>, vector<8x128xf32>
    %23 = arith.truncf %22 : vector<8x128xf32> to vector<8x128xbf16>
    %c0_14 = arith.constant 0 : index
    %c0_15 = arith.constant 0 : index
    %24 = vector.load %arg6[%c0_14, %c0_15] : memref<8x128xbf16, #tpu.memory_space<vmem>>, vector<8x128xbf16>
    tpu.vector_store %arg6[%c0_14, %c0_15], %23 {strides = array<i32>} : memref<8x128xbf16, #tpu.memory_space<vmem>>, vector<8x128xbf16>,
    return
  }
  func.func @transform_0(%arg0: i32) -> (i32, i32) {
    %c0_i32 = arith.constant 0 : i32
    %c0_i32_0 = arith.constant 0 : i32
    return %arg0, %c0_i32 : i32, i32
  }
  func.func @transform_1(%arg0: i32) -> (i32, i32) {
    %c0_i32 = arith.constant 0 : i32
    %c0_i32_0 = arith.constant 0 : i32
    %c0_i32_1 = arith.constant 0 : i32
    return %c0_i32, %c0_i32_0 : i32, i32
  }
  func.func @transform_2(%arg0: i32) -> (i32, i32) {
    %c0_i32 = arith.constant 0 : i32
    %c0_i32_0 = arith.constant 0 : i32
    %c0_i32_1 = arith.constant 0 : i32
    return %c0_i32, %c0_i32_0 : i32, i32
  }
  func.func @transform_3(%arg0: i32) -> (i32, i32) {
    %c0_i32 = arith.constant 0 : i32
    %c0_i32_0 = arith.constant 0 : i32
    %c0_i32_1 = arith.constant 0 : i32
    return %c0_i32, %c0_i32_0 : i32, i32
  }
  func.func @transform_4(%arg0: i32) -> (i32, i32) {
    %c0_i32 = arith.constant 0 : i32
    %c0_i32_0 = arith.constant 0 : i32
    %c0_i32_1 = arith.constant 0 : i32
    return %c0_i32, %c0_i32_0 : i32, i32
  }
  func.func @transform_5(%arg0: i32) -> (i32, i32) {
    %c0_i32 = arith.constant 0 : i32
    %c0_i32_0 = arith.constant 0 : i32
    return %arg0, %c0_i32 : i32, i32
  }
}

</mosaic_0001>

<llo_original>
// kernel: _regression_padded.1
$region0: #{_regression_padded.1}
  #allocation0 [shape = 'u32[]', space=smem, size = 0x4, offset = 0x4, fixed_abs, tag = 'smem constant byte address 0x4 - core index']
  #allocation1 [shape = 'u32[72,128]{1,0:T(1,128)}', space=vmem, size = 0x9000, scoped, tag = 'internal scratch']
  %s0 = inlined_call_operand.hbm [shape: f32[16,64], index: 0, kind: input, shape index: {}]
  %s1 = inlined_call_operand.hbm [shape: bf16[64,1024], index: 1, kind: input, shape index: {}]
  %s2 = inlined_call_operand.hbm [shape: f32[1,1024], index: 2, kind: input, shape index: {}]
  %s3 = inlined_call_operand.hbm [shape: bf16[1024,128], index: 3, kind: input, shape index: {}]
  %s4 = inlined_call_operand.vmem [shape: f32[1,128], index: 4, kind: input, shape index: {}]
  %s5 = inlined_call_operand.hbm [shape: bf16[16,128], index: 5, kind: output, shape index: {}]
  %s6 = sld [smem:[#allocation0]]
  $region69: #{_regression_padded.1} parent=0
    _
  %s8 = ssub.s32 1, %s6
  %s9 = scalar_select 0, %s8, %s6
  $region1: #{_regression_padded.1} parent=0
    #allocation2 [shape = 'u8[8192]{0}', space=vmem, size = 0x2000, scoped, tag = 'input window, operand 0']
    #allocation3 [shape = 's32[2]{0}', space=sflag, size = 0x8, scoped, tag = 'scoped memory for _regression_padded.1']
    #allocation4 [shape = 's32[2]{0}', space=sflag, size = 0x8, scoped, tag = 'scoped memory for _regression_padded.1']
    #allocation5 [shape = 'u8[131072]{0}', space=vmem, size = 0x20000, scoped, tag = 'input window, operand 1, single buffered']
    #allocation6 [shape = 's32[1]{0}', space=sflag, size = 0x4, scoped, tag = 'scoped memory for _regression_padded.1']
    #allocation7 [shape = 'u8[4096]{0}', space=vmem, size = 0x1000, scoped, tag = 'input window, operand 2, single buffered']
    #allocation8 [shape = 'u8[262144]{0}', space=vmem, size = 0x40000, scoped, tag = 'input window, operand 3, single buffered']
    #allocation9 [shape = 's32[1]{0}', space=sflag, size = 0x4, scoped, tag = 'scoped memory for _regression_padded.1']
    #allocation10 [shape = 'u8[4096]{0}', space=vmem, size = 0x1000, scoped, tag = 'output window, operand 0']
    %10 = vsyncpa [#allocation3], 0
    %s11 = scalar_lea.sflag [#allocation3], 1
    %12 = vsyncpa %s11, 0
    %13 = vsyncpa [#allocation6], 0
    %14 = vsyncpa [#allocation9], 0
    %15 = vsyncpa [#allocation4], 0
    %s16 = scalar_lea.sflag [#allocation4], 1
    %17 = vsyncpa %s16, 0
    loop: start=0, step=1, limit=4
    $region2: #{_regression_padded.1} parent=1 // loop_pre_header
      _
    $region3: #{_regression_padded.1} parent=1 // loop_header
      %s19 = sphi 0, %s23
      %p20 = scmp.ge.s32.totalorder %s19, 4
      %s29 = sphi 0, %s31
      %s32 = sphi 0, %s29
      %s33 = sphi 0, %s32
      %s49 = sphi 0, %s33
      %s53 = sphi 0, %s53
      %s55 = sphi 0, %s53
      %s56 = sphi 0, %s55
      %s70 = sphi 0, %s56
      %s74 = sphi 0, %s74
      %s76 = sphi 0, %s74
      %s77 = sphi 0, %s76
      %s91 = sphi 0, %s77
      %s95 = sphi 0, %s95
      %s97 = sphi 0, %s95
      %s98 = sphi 0, %s97
      %s112 = sphi 0, %s98
      %s116 = sphi 0, %s116
      %s118 = sphi 0, %s116
      %s119 = sphi 0, %s118
      %s133 = sphi 0, %s119
      %s139 = sphi 0, %s141
      %s142 = sphi 0, %s139
      %s143 = sphi 0, %s142
      %s159 = sphi 0, %s143
    $region4: #{_regression_padded.1} parent=1 // loop_header_branch
      %22 = sbr.rel (%p20) target = $region8
    $region5: #{_regression_padded.1} parent=1 // loop_body
      %s24 = ssub.s32 %s19, 1
      %s25 = ssub.s32 %s19, 2
      %s26 = sadd.s32 %s19, 1
      %s27 = ssub.s32 %s19, %s26
      %p28 = scmp.eq.s32.totalorder %s27, 0
      %s30 = sadd.s32 %s29, 1
      %s31 = scalar_select %p28, %s29, %s30
      %p34 = pneg %p28
      %p35 = scmp.eq.s32.totalorder %s19, 1
      %p36 = por %p34, %p35
      %p37 = scmp.ne.s32.totalorder %s29, %s32
      %p38 = scmp.eq.s32.totalorder %s19, 0
      %p39 = por %p37, %p38
      %p40 = scmp.ne.s32.totalorder %s29, %s32
      %p41 = scmp.eq.s32.totalorder %s24, 1
      %p42 = por %p40, %p41
      %p43 = scmp.ne.s32.totalorder %s32, %s33
      %p44 = scmp.eq.s32.totalorder %s24, 0
      %p45 = por %p43, %p44
      %p46 = scmp.ne.s32.totalorder %s32, %s33
      %p47 = scmp.eq.s32.totalorder %s25, 1
      %p48 = por %p46, %p47
      %p50 = scmp.ne.s32.totalorder %s33, %s49
      %p51 = scmp.eq.s32.totalorder %s25, 0
      %p52 = por %p50, %p51
      %s54 = sadd.s32 %s53, 1
      %p57 = scmp.eq.s32.totalorder %s19, 1
      %p58 = scmp.ne.s32.totalorder %s53, %s55
      %p59 = scmp.eq.s32.totalorder %s19, 0
      %p60 = por %p58, %p59
      %p61 = scmp.ne.s32.totalorder %s53, %s55
      %p62 = scmp.eq.s32.totalorder %s24, 1
      %p63 = por %p61, %p62
      %p64 = scmp.ne.s32.totalorder %s55, %s56
      %p65 = scmp.eq.s32.totalorder %s24, 0
      %p66 = por %p64, %p65
      %p67 = scmp.ne.s32.totalorder %s55, %s56
      %p68 = scmp.eq.s32.totalorder %s25, 1
      %p69 = por %p67, %p68
      %p71 = scmp.ne.s32.totalorder %s56, %s70
      %p72 = scmp.eq.s32.totalorder %s25, 0
      %p73 = por %p71, %p72
      %s75 = sadd.s32 %s74, 1
      %p78 = scmp.eq.s32.totalorder %s19, 1
      %p79 = scmp.ne.s32.totalorder %s74, %s76
      %p80 = scmp.eq.s32.totalorder %s19, 0
      %p81 = por %p79, %p80
      %p82 = scmp.ne.s32.totalorder %s74, %s76
      %p83 = scmp.eq.s32.totalorder %s24, 1
      %p84 = por %p82, %p83
      %p85 = scmp.ne.s32.totalorder %s76, %s77
      %p86 = scmp.eq.s32.totalorder %s24, 0
      %p87 = por %p85, %p86
      %p88 = scmp.ne.s32.totalorder %s76, %s77
      %p89 = scmp.eq.s32.totalorder %s25, 1
      %p90 = por %p88, %p89
      %p92 = scmp.ne.s32.totalorder %s77, %s91
      %p93 = scmp.eq.s32.totalorder %s25, 0
      %p94 = por %p92, %p93
      %s96 = sadd.s32 %s95, 1
      %p99 = scmp.eq.s32.totalorder %s19, 1
      %p100 = scmp.ne.s32.totalorder %s95, %s97
      %p101 = scmp.eq.s32.totalorder %s19, 0
      %p102 = por %p100, %p101
      %p103 = scmp.ne.s32.totalorder %s95, %s97
      %p104 = scmp.eq.s32.totalorder %s24, 1
      %p105 = por %p103, %p104
      %p106 = scmp.ne.s32.totalorder %s97, %s98
      %p107 = scmp.eq.s32.totalorder %s24, 0
      %p108 = por %p106, %p107
      %p109 = scmp.ne.s32.totalorder %s97, %s98
      %p110 = scmp.eq.s32.totalorder %s25, 1
      %p111 = por %p109, %p110
      %p113 = scmp.ne.s32.totalorder %s98, %s112
      %p114 = scmp.eq.s32.totalorder %s25, 0
      %p115 = por %p113, %p114
      %s117 = sadd.s32 %s116, 1
      %p120 = scmp.eq.s32.totalorder %s19, 1
      %p121 = scmp.ne.s32.totalorder %s116, %s118
      %p122 = scmp.eq.s32.totalorder %s19, 0
      %p123 = por %p121, %p122
      %p124 = scmp.ne.s32.totalorder %s116, %s118
      %p125 = scmp.eq.s32.totalorder %s24, 1
      %p126 = por %p124, %p125
      %p127 = scmp.ne.s32.totalorder %s118, %s119
      %p128 = scmp.eq.s32.totalorder %s24, 0
      %p129 = por %p127, %p128
      %p130 = scmp.ne.s32.totalorder %s118, %s119
      %p131 = scmp.eq.s32.totalorder %s25, 1
      %p132 = por %p130, %p131
      %p134 = scmp.ne.s32.totalorder %s119, %s133
      %p135 = scmp.eq.s32.totalorder %s25, 0
      %p136 = por %p134, %p135
      %s137 = ssub.s32 %s19, %s26
      %p138 = scmp.eq.s32.totalorder %s137, 0
      %s140 = sadd.s32 %s139, 1
      %s141 = scalar_select %p138, %s139, %s140
      %p144 = pneg %p138
      %p145 = scmp.eq.s32.totalorder %s19, 1
      %p146 = por %p144, %p145
      %p147 = scmp.ne.s32.totalorder %s139, %s142
      %p148 = scmp.eq.s32.totalorder %s19, 0
      %p149 = por %p147, %p148
      %p150 = scmp.ne.s32.totalorder %s139, %s142
      %p151 = scmp.eq.s32.totalorder %s24, 1
      %p152 = por %p150, %p151
      %p153 = scmp.ne.s32.totalorder %s142, %s143
      %p154 = scmp.eq.s32.totalorder %s24, 0
      %p155 = por %p153, %p154
      %p156 = scmp.ne.s32.totalorder %s142, %s143
      %p157 = scmp.eq.s32.totalorder %s25, 1
      %p158 = por %p156, %p157
      %p160 = scmp.ne.s32.totalorder %s143, %s159
      %p161 = scmp.eq.s32.totalorder %s25, 0
      %p162 = por %p160, %p161
      %p163 = scmp.le.s32.totalorder 1, %s19
      %p164 = scmp.lt.s32.totalorder %s19, 3
      %p165 = pnand %p163, %p164
      %p166 = pneg %p165
      // Predicated region
      $region9: #{_regression_padded.1} parent=5 // pred_check
        _
      $region10: #{_regression_padded.1} parent=5 // pred_check_branch
        %168 = sbr.rel (%p165) target = $region12
      $region11: #{_regression_padded.1} parent=5 // pred_region
        %s169 = ssub.s32 %s19, 1
        // Predicated region
        $region13: #{_regression_padded.1} parent=11 // pred_check
          %p170 = pneg %p66
        $region14: #{_regression_padded.1} parent=11 // pred_check_branch
          %172 = sbr.rel (%p170) target = $region16
        $region15: #{_regression_padded.1} parent=11 // pred_region
          %174 = vsyncadd [#allocation6], 0
          %s175 = sshll.u32 %s1, 4
          %s176 = int_to_ptr.hbm [resolvable:$true] %s175
          %s177 = sshll.u32 [#allocation5], 4
          %s178 = int_to_ptr.vmem [resolvable:$true] %s177
          %183 = dma.hbm_to_vmem [thread:$0]  %s176, 4096, %s178, [#allocation6], 512, 512, 32
        $region16: #{_regression_padded.1} parent=11 // pred_fallthru
          _
        // Predicated region
        $region17: #{_regression_padded.1} parent=11 // pred_check
          %p184 = pneg %p87
        $region18: #{_regression_padded.1} parent=11 // pred_check_branch
          %186 = sbr.rel (%p184) target = $region20
        $region19: #{_regression_padded.1} parent=11 // pred_region
          %188 = vsyncadd [#allocation6], 0
          %s190 = sshll.u32 %s2, 4
          %s191 = int_to_ptr.hbm [resolvable:$true] %s190
          %s192 = sshll.u32 [#allocation7], 4
          %s193 = int_to_ptr.vmem [resolvable:$true] %s192
          %195 = dma.hbm_to_vmem [thread:$0]  %s191, 128, %s193, [#allocation6]
        $region20: #{_regression_padded.1} parent=11 // pred_fallthru
          _
        // Predicated region
        $region21: #{_regression_padded.1} parent=11 // pred_check
          %p196 = pneg %p108
        $region22: #{_regression_padded.1} parent=11 // pred_check_branch
          %198 = sbr.rel (%p196) target = $region24
        $region23: #{_regression_padded.1} parent=11 // pred_region
          %200 = vsyncadd [#allocation9], 0
          %s201 = sshll.u32 %s3, 4
          %s202 = int_to_ptr.hbm [resolvable:$true] %s201
          %s203 = sshll.u32 [#allocation8], 4
          %s204 = int_to_ptr.vmem [resolvable:$true] %s203
          %209 = dma.hbm_to_vmem [thread:$0]  %s202, 8192, %s204, [#allocation9], 64, 64, 4
        $region24: #{_regression_padded.1} parent=11 // pred_fallthru
          _
        // Predicated region
        $region25: #{_regression_padded.1} parent=11 // pred_check
          %p210 = pneg %p129
        $region26: #{_regression_padded.1} parent=11 // pred_check_branch
          %212 = sbr.rel (%p210) target = $region28
        $region27: #{_regression_padded.1} parent=11 // pred_region
          _
        $region28: #{_regression_padded.1} parent=11 // pred_fallthru
          _
      $region12: #{_regression_padded.1} parent=5 // pred_fallthru
        _
      %p213 = scmp.lt.s32.totalorder %s19, 2
      // Predicated region
      $region29: #{_regression_padded.1} parent=5 // pred_check
        %p214 = pneg %p213
      $region30: #{_regression_padded.1} parent=5 // pred_check_branch
        %216 = sbr.rel (%p214) target = $region32
      $region31: #{_regression_padded.1} parent=5 // pred_region
        // Predicated region
        $region33: #{_regression_padded.1} parent=31 // pred_check
          %p217 = pneg %p39
        $region34: #{_regression_padded.1} parent=31 // pred_check_branch
          %219 = sbr.rel (%p217) target = $region36
        $region35: #{_regression_padded.1} parent=31 // pred_region
          %s220 = sand.u32 %s29, 1
          %s221 = scalar_lea.sflag [#allocation3], %s220
          %s222 = sand.u32 %s29, 1
          %s223 = smul.addr %s222, 8
          %s224 = scalar_lea.vmem [#allocation2], %s223
          %226 = vsyncadd %s221, 0
          %s227 = smul.addr %s19, 8
          %s228 = scalar_lea.hbm %s0, %s227
          %s230 = sshll.u32 %s228, 4
          %s231 = int_to_ptr.hbm [resolvable:$true] %s230
          %s232 = sshll.u32 %s224, 4
          %s233 = int_to_ptr.vmem [resolvable:$true] %s232
          %235 = dma.hbm_to_vmem [thread:$0]  %s231, 128, %s233, %s221
        $region36: #{_regression_padded.1} parent=31 // pred_fallthru
          _
      $region32: #{_regression_padded.1} parent=5 // pred_fallthru
        _
      %p236 = scmp.le.s32.totalorder 1, %s19
      %p237 = scmp.lt.s32.totalorder %s19, 3
      %p238 = pnand %p236, %p237
      %p239 = pneg %p238
      // Predicated region
      $region37: #{_regression_padded.1} parent=5 // pred_check
        _
      $region38: #{_regression_padded.1} parent=5 // pred_check_branch
        %241 = sbr.rel (%p238) target = $region40
      $region39: #{_regression_padded.1} parent=5 // pred_region
        %s242 = ssub.s32 %s19, 1
        %s243 = sand.u32 %s32, 1
        %s244 = scalar_lea.sflag [#allocation3], %s243
        %s245 = sand.u32 %s32, 1
        %s246 = smul.addr %s245, 8
        %s247 = scalar_lea.vmem [#allocation2], %s246
        // Predicated region
        $region41: #{_regression_padded.1} parent=39 // pred_check
          %p248 = pneg %p45
        $region42: #{_regression_padded.1} parent=39 // pred_check_branch
          %250 = sbr.rel (%p248) target = $region44
        $region43: #{_regression_padded.1} parent=39 // pred_region
          %252 = dma.done %s244, 128
        $region44: #{_regression_padded.1} parent=39 // pred_fallthru
          _
        // Predicated region
        $region45: #{_regression_padded.1} parent=39 // pred_check
          %p253 = pneg %p66
        $region46: #{_regression_padded.1} parent=39 // pred_check_branch
          %255 = sbr.rel (%p253) target = $region48
        $region47: #{_regression_padded.1} parent=39 // pred_region
          %257 = dma.done [#allocation6], 4096
        $region48: #{_regression_padded.1} parent=39 // pred_fallthru
          _
        // Predicated region
        $region49: #{_regression_padded.1} parent=39 // pred_check
          %p258 = pneg %p87
        $region50: #{_regression_padded.1} parent=39 // pred_check_branch
          %260 = sbr.rel (%p258) target = $region52
        $region51: #{_regression_padded.1} parent=39 // pred_region
          %262 = dma.done [#allocation6], 128
        $region52: #{_regression_padded.1} parent=39 // pred_fallthru
          _
        // Predicated region
        $region53: #{_regression_padded.1} parent=39 // pred_check
          %p263 = pneg %p108
        $region54: #{_regression_padded.1} parent=39 // pred_check_branch
          %265 = sbr.rel (%p263) target = $region56
        $region55: #{_regression_padded.1} parent=39 // pred_region
          %267 = dma.done [#allocation9], 8192
        $region56: #{_regression_padded.1} parent=39 // pred_fallthru
          _
        %s268 = sand.u32 %s32, 1
        %s269 = scalar_lea.sflag [#allocation3], %s268
        %s270 = sand.u32 %s32, 1
        %s271 = smul.addr %s270, 8
        %s272 = scalar_lea.vmem [#allocation2], %s271
        %p273 = pneg %p45
        %p274 = pneg %p42
        %p275 = pneg %p66
        %p276 = pneg %p63
        %p277 = pneg %p87
        %p278 = pneg %p84
        %p279 = pneg %p108
        %p280 = pneg %p105
        %p281 = pneg %p129
        %p282 = pneg %p126
        %p283 = pneg %p155
        %p284 = pneg %p152
        %s285 = sand.u32 %s142, 1
        %s286 = scalar_lea.sflag [#allocation4], %s285
        %s287 = sand.u32 %s142, 1
        %s288 = smul.addr %s287, 4
        %s289 = scalar_lea.vmem [#allocation10], %s288
        %v291 = vld [vmem:[%s247] sm:$0xff]
        %v292 = vpack.c.bf16 %v291, %v291
        %v293 = vld [vmem:[#allocation5] sm:$0xff]
        %v294 = vld [vmem:[#allocation5 + $0x8] sm:$0xff]
        %v295 = vld [vmem:[#allocation5 + $0x10] sm:$0xff]
        %v296 = vld [vmem:[#allocation5 + $0x18] sm:$0xff]
        %v297 = vld [vmem:[#allocation5 + $0x20] sm:$0xff]
        %v298 = vld [vmem:[#allocation5 + $0x28] sm:$0xff]
        %v299 = vld [vmem:[#allocation5 + $0x30] sm:$0xff]
        %v300 = vld [vmem:[#allocation5 + $0x38] sm:$0xff]
        %v301 = vld [vmem:[#allocation5 + $0x40] sm:$0xff]
        %v302 = vld [vmem:[#allocation5 + $0x48] sm:$0xff]
        %v303 = vld [vmem:[#allocation5 + $0x50] sm:$0xff]
        %v304 = vld [vmem:[#allocation5 + $0x58] sm:$0xff]
        %v305 = vld [vmem:[#allocation5 + $0x60] sm:$0xff]
        %v306 = vld [vmem:[#allocation5 + $0x68] sm:$0xff]
        %v307 = vld [vmem:[#allocation5 + $0x70] sm:$0xff]
        %v308 = vld [vmem:[#allocation5 + $0x78] sm:$0xff]
        %v309 = vld [vmem:[#allocation5 + $0x80] sm:$0xff]
        %v310 = vld [vmem:[#allocation5 + $0x88] sm:$0xff]
        %v311 = vld [vmem:[#allocation5 + $0x90] sm:$0xff]
        %v312 = vld [vmem:[#allocation5 + $0x98] sm:$0xff]
        %v313 = vld [vmem:[#allocation5 + $0xa0] sm:$0xff]
        %v314 = vld [vmem:[#allocation5 + $0xa8] sm:$0xff]
        %v315 = vld [vmem:[#allocation5 + $0xb0] sm:$0xff]
        %v316 = vld [vmem:[#allocation5 + $0xb8] sm:$0xff]
        %v317 = vld [vmem:[#allocation5 + $0xc0] sm:$0xff]
        %v318 = vld [vmem:[#allocation5 + $0xc8] sm:$0xff]
        %v319 = vld [vmem:[#allocation5 + $0xd0] sm:$0xff]
        %v320 = vld [vmem:[#allocation5 + $0xd8] sm:$0xff]
        %v321 = vld [vmem:[#allocation5 + $0xe0] sm:$0xff]
        %v322 = vld [vmem:[#allocation5 + $0xe8] sm:$0xff]
        %v323 = vld [vmem:[#allocation5 + $0xf0] sm:$0xff]
        %v324 = vld [vmem:[#allocation5 + $0xf8] sm:$0xff]
        %v325 = vld [vmem:[#allocation7] sm:$0xff]
        %v327 = vperm.slane %v325, 0
        %v328 = vperm.slane %v325, 1
        %v329 = vperm.slane %v325, 2
        %v330 = vperm.slane %v325, 3
        %v331 = vperm.slane %v325, 4
        %v332 = vperm.slane %v325, 5
        %v333 = vperm.slane %v325, 6
        %v334 = vperm.slane %v325, 7
        %v375 = vunpack.c.l.b16 %v293
        %v376 = vunpack.c.h.b16 %v293
        %v377 = vunpack.c.l.b16 %v294
        %v378 = vunpack.c.h.b16 %v294
        %v379 = vunpack.c.l.b16 %v295
        %v380 = vunpack.c.h.b16 %v295
        %v381 = vunpack.c.l.b16 %v296
        %v382 = vunpack.c.h.b16 %v296
        %v383 = vunpack.c.l.b16 %v297
        %v384 = vunpack.c.h.b16 %v297
        %v385 = vunpack.c.l.b16 %v298
        %v386 = vunpack.c.h.b16 %v298
        %v387 = vunpack.c.l.b16 %v299
        %v388 = vunpack.c.h.b16 %v299
        %v389 = vunpack.c.l.b16 %v300
        %v390 = vunpack.c.h.b16 %v300
        %v391 = vunpack.c.l.b16 %v301
        %v392 = vunpack.c.h.b16 %v301
        %v393 = vunpack.c.l.b16 %v302
        %v394 = vunpack.c.h.b16 %v302
        %v395 = vunpack.c.l.b16 %v303
        %v396 = vunpack.c.h.b16 %v303
        %v397 = vunpack.c.l.b16 %v304
        %v398 = vunpack.c.h.b16 %v304
        %v399 = vunpack.c.l.b16 %v305
        %v400 = vunpack.c.h.b16 %v305
        %v401 = vunpack.c.l.b16 %v306
        %v402 = vunpack.c.h.b16 %v306
        %v403 = vunpack.c.l.b16 %v307
        %v404 = vunpack.c.h.b16 %v307
        %v405 = vunpack.c.l.b16 %v308
        %v406 = vunpack.c.h.b16 %v308
        %v407 = vunpack.c.l.b16 %v309
        %v408 = vunpack.c.h.b16 %v309
        %v409 = vunpack.c.l.b16 %v310
        %v410 = vunpack.c.h.b16 %v310
        %v411 = vunpack.c.l.b16 %v311
        %v412 = vunpack.c.h.b16 %v311
        %v413 = vunpack.c.l.b16 %v312
        %v414 = vunpack.c.h.b16 %v312
        %v415 = vunpack.c.l.b16 %v313
        %v416 = vunpack.c.h.b16 %v313
        %v417 = vunpack.c.l.b16 %v314
        %v418 = vunpack.c.h.b16 %v314
        %v419 = vunpack.c.l.b16 %v315
        %v420 = vunpack.c.h.b16 %v315
        %v421 = vunpack.c.l.b16 %v316
        %v422 = vunpack.c.h.b16 %v316
        %v423 = vunpack.c.l.b16 %v317
        %v424 = vunpack.c.h.b16 %v317
        %v425 = vunpack.c.l.b16 %v318
        %v426 = vunpack.c.h.b16 %v318
        %v427 = vunpack.c.l.b16 %v319
        %v428 = vunpack.c.h.b16 %v319
        %v429 = vunpack.c.l.b16 %v320
        %v430 = vunpack.c.h.b16 %v320
        %v431 = vunpack.c.l.b16 %v321
        %v432 = vunpack.c.h.b16 %v321
        %v433 = vunpack.c.l.b16 %v322
        %v434 = vunpack.c.h.b16 %v322
        %v435 = vunpack.c.l.b16 %v323
        %v436 = vunpack.c.h.b16 %v323
        %v437 = vunpack.c.l.b16 %v324
        %v438 = vunpack.c.h.b16 %v324
        %v439 = vpack.c.b16 %v383, %v375
        %v440 = vpack.c.b16 %v384, %v376
        %v441 = vpack.c.b16 %v385, %v377
        %v442 = vpack.c.b16 %v386, %v378
        %v443 = vpack.c.b16 %v387, %v379
        %v444 = vpack.c.b16 %v388, %v380
        %v445 = vpack.c.b16 %v389, %v381
        %v446 = vpack.c.b16 %v390, %v382
        %v447 = vpack.c.b16 %v399, %v391
        %v448 = vpack.c.b16 %v400, %v392
        %v449 = vpack.c.b16 %v401, %v393
        %v450 = vpack.c.b16 %v402, %v394
        %v451 = vpack.c.b16 %v403, %v395
        %v452 = vpack.c.b16 %v404, %v396
        %v453 = vpack.c.b16 %v405, %v397
        %v454 = vpack.c.b16 %v406, %v398
        %v455 = vpack.c.b16 %v415, %v407
        %v456 = vpack.c.b16 %v416, %v408
        %v457 = vpack.c.b16 %v417, %v409
        %v458 = vpack.c.b16 %v418, %v410
        %v459 = vpack.c.b16 %v419, %v411
        %v460 = vpack.c.b16 %v420, %v412
        %v461 = vpack.c.b16 %v421, %v413
        %v462 = vpack.c.b16 %v422, %v414
        %v463 = vpack.c.b16 %v431, %v423
        %v464 = vpack.c.b16 %v432, %v424
        %v465 = vpack.c.b16 %v433, %v425
        %v466 = vpack.c.b16 %v434, %v426
        %v467 = vpack.c.b16 %v435, %v427
        %v468 = vpack.c.b16 %v436, %v428
        %v469 = vpack.c.b16 %v437, %v429
        %v470 = vpack.c.b16 %v438, %v430
        %vm503 = vcmask 523264
        %v505 = vsel %vm503, %v292, 0
        %507 = vmatpush.bf16.msra.mxu0 0
        %508 = vmatpush.bf16.msra.mxu0 0
        %509 = vmatpush.bf16.msra.mxu0 0
        %510 = vmatpush.bf16.msra.mxu0 0
        %511 = vmatpush.bf16.msra.mxu0 %v463
        %512 = vmatpush.bf16.msra.mxu0 %v455
        %513 = vmatpush.bf16.msra.mxu0 %v447
        %514 = vmatpush.bf16.msra.mxu0 %v439
        %515 = vmatmul.bf16.gmra.mxu0 %v505
        %v516 = vpop.f32.mrf.mxu0
        %v517 = vadd.f32 %v327, %v516
        %v518 = vpop.f32.mrf.mxu0
        %519 = vdwg.mxu0
        %520 = vmatpush.bf16.msra.mxu0 0
        %521 = vmatpush.bf16.msra.mxu0 0
        %522 = vmatpush.bf16.msra.mxu0 0
        %523 = vmatpush.bf16.msra.mxu0 0
        %524 = vmatpush.bf16.msra.mxu0 %v464
        %525 = vmatpush.bf16.msra.mxu0 %v456
        %526 = vmatpush.bf16.msra.mxu0 %v448
        %527 = vmatpush.bf16.msra.mxu0 %v440
        %528 = vmatmul.bf16.gmra.mxu0 %v505
        %v529 = vpop.f32.mrf.mxu0
        %v530 = vadd.f32 %v328, %v529
        %v531 = vpop.f32.mrf.mxu0
        %532 = vdwg.mxu0
        %533 = vmatpush.bf16.msra.mxu0 0
        %534 = vmatpush.bf16.msra.mxu0 0
        %535 = vmatpush.bf16.msra.mxu0 0
        %536 = vmatpush.bf16.msra.mxu0 0
        %537 = vmatpush.bf16.msra.mxu0 %v465
        %538 = vmatpush.bf16.msra.mxu0 %v457
        %539 = vmatpush.bf16.msra.mxu0 %v449
        %540 = vmatpush.bf16.msra.mxu0 %v441
        %541 = vmatmul.bf16.gmra.mxu0 %v505
        %v542 = vpop.f32.mrf.mxu0
        %v543 = vadd.f32 %v329, %v542
        %v544 = vpop.f32.mrf.mxu0
        %545 = vdwg.mxu0
        %546 = vmatpush.bf16.msra.mxu0 0
        %547 = vmatpush.bf16.msra.mxu0 0
        %548 = vmatpush.bf16.msra.mxu0 0
        %549 = vmatpush.bf16.msra.mxu0 0
        %550 = vmatpush.bf16.msra.mxu0 %v466
        %551 = vmatpush.bf16.msra.mxu0 %v458
        %552 = vmatpush.bf16.msra.mxu0 %v450
        %553 = vmatpush.bf16.msra.mxu0 %v442
        %554 = vmatmul.bf16.gmra.mxu0 %v505
        %v555 = vpop.f32.mrf.mxu0
        %v556 = vadd.f32 %v330, %v555
        %v557 = vpop.f32.mrf.mxu0
        %558 = vdwg.mxu0
        %559 = vmatpush.bf16.msra.mxu0 0
        %560 = vmatpush.bf16.msra.mxu0 0
        %561 = vmatpush.bf16.msra.mxu0 0
        %562 = vmatpush.bf16.msra.mxu0 0
        %563 = vmatpush.bf16.msra.mxu0 %v467
        %564 = vmatpush.bf16.msra.mxu0 %v459
        %565 = vmatpush.bf16.msra.mxu0 %v451
        %566 = vmatpush.bf16.msra.mxu0 %v443
        %567 = vmatmul.bf16.gmra.mxu0 %v505
        %v568 = vpop.f32.mrf.mxu0
        %v569 = vadd.f32 %v331, %v568
        %v570 = vpop.f32.mrf.mxu0
        %571 = vdwg.mxu0
        %572 = vmatpush.bf16.msra.mxu0 0
        %573 = vmatpush.bf16.msra.mxu0 0
        %574 = vmatpush.bf16.msra.mxu0 0
        %575 = vmatpush.bf16.msra.mxu0 0
        %576 = vmatpush.bf16.msra.mxu0 %v468
        %577 = vmatpush.bf16.msra.mxu0 %v460
        %578 = vmatpush.bf16.msra.mxu0 %v452
        %579 = vmatpush.bf16.msra.mxu0 %v444
        %580 = vmatmul.bf16.gmra.mxu0 %v505
        %v581 = vpop.f32.mrf.mxu0
        %v582 = vadd.f32 %v332, %v581
        %v583 = vpop.f32.mrf.mxu0
        %584 = vdwg.mxu0
        %585 = vmatpush.bf16.msra.mxu0 0
        %586 = vmatpush.bf16.msra.mxu0 0
        %587 = vmatpush.bf16.msra.mxu0 0
        %588 = vmatpush.bf16.msra.mxu0 0
        %589 = vmatpush.bf16.msra.mxu0 %v469
        %590 = vmatpush.bf16.msra.mxu0 %v461
        %591 = vmatpush.bf16.msra.mxu0 %v453
        %592 = vmatpush.bf16.msra.mxu0 %v445
        %593 = vmatmul.bf16.gmra.mxu0 %v505
        %v594 = vpop.f32.mrf.mxu0
        %v595 = vadd.f32 %v333, %v594
        %v596 = vpop.f32.mrf.mxu0
        %597 = vdwg.mxu0
        %598 = vmatpush.bf16.msra.mxu0 0
        %599 = vmatpush.bf16.msra.mxu0 0
        %600 = vmatpush.bf16.msra.mxu0 0
        %601 = vmatpush.bf16.msra.mxu0 0
        %602 = vmatpush.bf16.msra.mxu0 %v470
        %603 = vmatpush.bf16.msra.mxu0 %v462
        %604 = vmatpush.bf16.msra.mxu0 %v454
        %605 = vmatpush.bf16.msra.mxu0 %v446
        %606 = vmatmul.bf16.gmra.mxu0 %v505
        %v607 = vpop.f32.mrf.mxu0
        %v608 = vadd.f32 %v334, %v607
        %v609 = vpop.f32.mrf.mxu0
        %610 = vdwg.mxu0
        %vm611 = vcmp.ge.f32.partialorder %v517, 0.0
        %vm612 = vcmp.ge.f32.partialorder %v530, 0.0
        %vm613 = vcmp.ge.f32.partialorder %v543, 0.0
        %vm614 = vcmp.ge.f32.partialorder %v556, 0.0
        %vm615 = vcmp.ge.f32.partialorder %v569, 0.0
        %vm616 = vcmp.ge.f32.partialorder %v582, 0.0
        %vm617 = vcmp.ge.f32.partialorder %v595, 0.0
        %vm618 = vcmp.ge.f32.partialorder %v608, 0.0
        %v619 = vmul.f32 %v517, 0.01
        %v620 = vmul.f32 %v530, 0.01
        %v621 = vmul.f32 %v543, 0.01
        %v622 = vmul.f32 %v556, 0.01
        %v623 = vmul.f32 %v569, 0.01
        %v624 = vmul.f32 %v582, 0.01
        %v625 = vmul.f32 %v595, 0.01
        %v626 = vmul.f32 %v608, 0.01
        %v627 = vsel %vm611, %v517, %v619
        %v628 = vsel %vm612, %v530, %v620
        %v629 = vsel %vm613, %v543, %v621
        %v630 = vsel %vm614, %v556, %v622
        %v631 = vsel %vm615, %v569, %v623
        %v632 = vsel %vm616, %v582, %v624
        %v633 = vsel %vm617, %v595, %v625
        %v634 = vsel %vm618, %v608, %v626
        %v635 = vpack.c.bf16 %v627, %v627
        %v636 = vpack.c.bf16 %v628, %v628
        %v637 = vpack.c.bf16 %v629, %v629
        %v638 = vpack.c.bf16 %v630, %v630
        %v639 = vpack.c.bf16 %v631, %v631
        %v640 = vpack.c.bf16 %v632, %v632
        %v641 = vpack.c.bf16 %v633, %v633
        %v642 = vpack.c.bf16 %v634, %v634
        %v643 = vld [vmem:[#allocation8] sm:$0xf]
        %v644 = vld [vmem:[#allocation8 + $0x4] sm:$0xf]
        %v645 = vld [vmem:[#allocation8 + $0x8] sm:$0xf]
        %v646 = vld [vmem:[#allocation8 + $0xc] sm:$0xf]
        %v647 = vld [vmem:[#allocation8 + $0x10] sm:$0xf]
        %v648 = vld [vmem:[#allocation8 + $0x14] sm:$0xf]
        %v649 = vld [vmem:[#allocation8 + $0x18] sm:$0xf]
        %v650 = vld [vmem:[#allocation8 + $0x1c] sm:$0xf]
        %v651 = vld [vmem:[#allocation8 + $0x20] sm:$0xf]
        %v652 = vld [vmem:[#allocation8 + $0x24] sm:$0xf]
        %v653 = vld [vmem:[#allocation8 + $0x28] sm:$0xf]
        %v654 = vld [vmem:[#allocation8 + $0x2c] sm:$0xf]
        %v655 = vld [vmem:[#allocation8 + $0x30] sm:$0xf]
        %v656 = vld [vmem:[#allocation8 + $0x34] sm:$0xf]
        %v657 = vld [vmem:[#allocation8 + $0x38] sm:$0xf]
        %v658 = vld [vmem:[#allocation8 + $0x3c] sm:$0xf]
        %v659 = vld [vmem:[#allocation8 + $0x40] sm:$0xf]
        %v660 = vld [vmem:[#allocation8 + $0x44] sm:$0xf]
        %v661 = vld [vmem:[#allocation8 + $0x48] sm:$0xf]
        %v662 = vld [vmem:[#allocation8 + $0x4c] sm:$0xf]
        %v663 = vld [vmem:[#allocation8 + $0x50] sm:$0xf]
        %v664 = vld [vmem:[#allocation8 + $0x54] sm:$0xf]
        %v665 = vld [vmem:[#allocation8 + $0x58] sm:$0xf]
        %v666 = vld [vmem:[#allocation8 + $0x5c] sm:$0xf]
        %v667 = vld [vmem:[#allocation8 + $0x60] sm:$0xf]
        %v668 = vld [vmem:[#allocation8 + $0x64] sm:$0xf]
        %v669 = vld [vmem:[#allocation8 + $0x68] sm:$0xf]
        %v670 = vld [vmem:[#allocation8 + $0x6c] sm:$0xf]
        %v671 = vld [vmem:[#allocation8 + $0x70] sm:$0xf]
        %v672 = vld [vmem:[#allocation8 + $0x74] sm:$0xf]
        %v673 = vld [vmem:[#allocation8 + $0x78] sm:$0xf]
        %v674 = vld [vmem:[#allocation8 + $0x7c] sm:$0xf]
        %v675 = vld [vmem:[#allocation8 + $0x80] sm:$0xf]
        %v676 = vld [vmem:[#allocation8 + $0x84] sm:$0xf]
        %v677 = vld [vmem:[#allocation8 + $0x88] sm:$0xf]
        %v678 = vld [vmem:[#allocation8 + $0x8c] sm:$0xf]
        %v679 = vld [vmem:[#allocation8 + $0x90] sm:$0xf]
        %v680 = vld [vmem:[#allocation8 + $0x94] sm:$0xf]
        %v681 = vld [vmem:[#allocation8 + $0x98] sm:$0xf]
        %v682 = vld [vmem:[#allocation8 + $0x9c] sm:$0xf]
        %v683 = vld [vmem:[#allocation8 + $0xa0] sm:$0xf]
        %v684 = vld [vmem:[#allocation8 + $0xa4] sm:$0xf]
        %v685 = vld [vmem:[#allocation8 + $0xa8] sm:$0xf]
        %v686 = vld [vmem:[#allocation8 + $0xac] sm:$0xf]
        %v687 = vld [vmem:[#allocation8 + $0xb0] sm:$0xf]
        %v688 = vld [vmem:[#allocation8 + $0xb4] sm:$0xf]
        %v689 = vld [vmem:[#allocation8 + $0xb8] sm:$0xf]
        %v690 = vld [vmem:[#allocation8 + $0xbc] sm:$0xf]
        %v691 = vld [vmem:[#allocation8 + $0xc0] sm:$0xf]
        %v692 = vld [vmem:[#allocation8 + $0xc4] sm:$0xf]
        %v693 = vld [vmem:[#allocation8 + $0xc8] sm:$0xf]
        %v694 = vld [vmem:[#allocation8 + $0xcc] sm:$0xf]
        %v695 = vld [vmem:[#allocation8 + $0xd0] sm:$0xf]
        %v696 = vld [vmem:[#allocation8 + $0xd4] sm:$0xf]
        %v697 = vld [vmem:[#allocation8 + $0xd8] sm:$0xf]
        %v698 = vld [vmem:[#allocation8 + $0xdc] sm:$0xf]
        %v699 = vld [vmem:[#allocation8 + $0xe0] sm:$0xf]
        %v700 = vld [vmem:[#allocation8 + $0xe4] sm:$0xf]
        %v701 = vld [vmem:[#allocation8 + $0xe8] sm:$0xf]
        %v702 = vld [vmem:[#allocation8 + $0xec] sm:$0xf]
        %v703 = vld [vmem:[#allocation8 + $0xf0] sm:$0xf]
        %v704 = vld [vmem:[#allocation8 + $0xf4] sm:$0xf]
        %v705 = vld [vmem:[#allocation8 + $0xf8] sm:$0xf]
        %v706 = vld [vmem:[#allocation8 + $0xfc] sm:$0xf]
        %v707 = vld [vmem:[#allocation8 + $0x100] sm:$0xf]
        %v708 = vld [vmem:[#allocation8 + $0x104] sm:$0xf]
        %v709 = vld [vmem:[#allocation8 + $0x108] sm:$0xf]
        %v710 = vld [vmem:[#allocation8 + $0x10c] sm:$0xf]
        %v711 = vld [vmem:[#allocation8 + $0x110] sm:$0xf]
        %v712 = vld [vmem:[#allocation8 + $0x114] sm:$0xf]
        %v713 = vld [vmem:[#allocation8 + $0x118] sm:$0xf]
        %v714 = vld [vmem:[#allocation8 + $0x11c] sm:$0xf]
        %v715 = vld [vmem:[#allocation8 + $0x120] sm:$0xf]
        %v716 = vld [vmem:[#allocation8 + $0x124] sm:$0xf]
        %v717 = vld [vmem:[#allocation8 + $0x128] sm:$0xf]
        %v718 = vld [vmem:[#allocation8 + $0x12c] sm:$0xf]
        %v719 = vld [vmem:[#allocation8 + $0x130] sm:$0xf]
        %v720 = vld [vmem:[#allocation8 + $0x134] sm:$0xf]
        %v721 = vld [vmem:[#allocation8 + $0x138] sm:$0xf]
        %v722 = vld [vmem:[#allocation8 + $0x13c] sm:$0xf]
        %v723 = vld [vmem:[#allocation8 + $0x140] sm:$0xf]
        %v724 = vld [vmem:[#allocation8 + $0x144] sm:$0xf]
        %v725 = vld [vmem:[#allocation8 + $0x148] sm:$0xf]
        %v726 = vld [vmem:[#allocation8 + $0x14c] sm:$0xf]
        %v727 = vld [vmem:[#allocation8 + $0x150] sm:$0xf]
        %v728 = vld [vmem:[#allocation8 + $0x154] sm:$0xf]
        %v729 = vld [vmem:[#allocation8 + $0x158] sm:$0xf]
        %v730 = vld [vmem:[#allocation8 + $0x15c] sm:$0xf]
        %v731 = vld [vmem:[#allocation8 + $0x160] sm:$0xf]
        %v732 = vld [vmem:[#allocation8 + $0x164] sm:$0xf]
        %v733 = vld [vmem:[#allocation8 + $0x168] sm:$0xf]
        %v734 = vld [vmem:[#allocation8 + $0x16c] sm:$0xf]
        %v735 = vld [vmem:[#allocation8 + $0x170] sm:$0xf]
        %v736 = vld [vmem:[#allocation8 + $0x174] sm:$0xf]
        %v737 = vld [vmem:[#allocation8 + $0x178] sm:$0xf]
        %v738 = vld [vmem:[#allocation8 + $0x17c] sm:$0xf]
        %v739 = vld [vmem:[#allocation8 + $0x180] sm:$0xf]
        %v740 = vld [vmem:[#allocation8 + $0x184] sm:$0xf]
        %v741 = vld [vmem:[#allocation8 + $0x188] sm:$0xf]
        %v742 = vld [vmem:[#allocation8 + $0x18c] sm:$0xf]
        %v743 = vld [vmem:[#allocation8 + $0x190] sm:$0xf]
        %v744 = vld [vmem:[#allocation8 + $0x194] sm:$0xf]
        %v745 = vld [vmem:[#allocation8 + $0x198] sm:$0xf]
        %v746 = vld [vmem:[#allocation8 + $0x19c] sm:$0xf]
        %v747 = vld [vmem:[#allocation8 + $0x1a0] sm:$0xf]
        %v748 = vld [vmem:[#allocation8 + $0x1a4] sm:$0xf]
        %v749 = vld [vmem:[#allocation8 + $0x1a8] sm:$0xf]
        %v750 = vld [vmem:[#allocation8 + $0x1ac] sm:$0xf]
        %v751 = vld [vmem:[#allocation8 + $0x1b0] sm:$0xf]
        %v752 = vld [vmem:[#allocation8 + $0x1b4] sm:$0xf]
        %v753 = vld [vmem:[#allocation8 + $0x1b8] sm:$0xf]
        %v754 = vld [vmem:[#allocation8 + $0x1bc] sm:$0xf]
        %v755 = vld [vmem:[#allocation8 + $0x1c0] sm:$0xf]
        %v756 = vld [vmem:[#allocation8 + $0x1c4] sm:$0xf]
        %v757 = vld [vmem:[#allocation8 + $0x1c8] sm:$0xf]
        %v758 = vld [vmem:[#allocation8 + $0x1cc] sm:$0xf]
        %v759 = vld [vmem:[#allocation8 + $0x1d0] sm:$0xf]
        %v760 = vld [vmem:[#allocation8 + $0x1d4] sm:$0xf]
        %v761 = vld [vmem:[#allocation8 + $0x1d8] sm:$0xf]
        %v762 = vld [vmem:[#allocation8 + $0x1dc] sm:$0xf]
        %v763 = vld [vmem:[#allocation8 + $0x1e0] sm:$0xf]
        %v764 = vld [vmem:[#allocation8 + $0x1e4] sm:$0xf]
        %v765 = vld [vmem:[#allocation8 + $0x1e8] sm:$0xf]
        %v766 = vld [vmem:[#allocation8 + $0x1ec] sm:$0xf]
        %v767 = vld [vmem:[#allocation8 + $0x1f0] sm:$0xf]
        %v768 = vld [vmem:[#allocation8 + $0x1f4] sm:$0xf]
        %v769 = vld [vmem:[#allocation8 + $0x1f8] sm:$0xf]
        %v770 = vld [vmem:[#allocation8 + $0x1fc] sm:$0xf]
        %v771 = vld [vmem:[%s4] sm:$0x1]
        %v773 = vperm.slane %v771, 0
        %v903 = vunpack.c.l.b16 %v643
        %v904 = vunpack.c.l.b16 %v644
        %v905 = vunpack.c.l.b16 %v645
        %v906 = vunpack.c.l.b16 %v646
        %v907 = vunpack.c.l.b16 %v647
        %v908 = vunpack.c.l.b16 %v648
        %v909 = vunpack.c.l.b16 %v649
        %v910 = vunpack.c.l.b16 %v650
        %v911 = vunpack.c.l.b16 %v651
        %v912 = vunpack.c.l.b16 %v652
        %v913 = vunpack.c.l.b16 %v653
        %v914 = vunpack.c.l.b16 %v654
        %v915 = vunpack.c.l.b16 %v655
        %v916 = vunpack.c.l.b16 %v656
        %v917 = vunpack.c.l.b16 %v657
        %v918 = vunpack.c.l.b16 %v658
        %v919 = vunpack.c.l.b16 %v659
        %v920 = vunpack.c.l.b16 %v660
        %v921 = vunpack.c.l.b16 %v661
        %v922 = vunpack.c.l.b16 %v662
        %v923 = vunpack.c.l.b16 %v663
        %v924 = vunpack.c.l.b16 %v664
        %v925 = vunpack.c.l.b16 %v665
        %v926 = vunpack.c.l.b16 %v666
        %v927 = vunpack.c.l.b16 %v667
        %v928 = vunpack.c.l.b16 %v668
        %v929 = vunpack.c.l.b16 %v669
        %v930 = vunpack.c.l.b16 %v670
        %v931 = vunpack.c.l.b16 %v671
        %v932 = vunpack.c.l.b16 %v672
        %v933 = vunpack.c.l.b16 %v673
        %v934 = vunpack.c.l.b16 %v674
        %v935 = vunpack.c.l.b16 %v675
        %v936 = vunpack.c.l.b16 %v676
        %v937 = vunpack.c.l.b16 %v677
        %v938 = vunpack.c.l.b16 %v678
        %v939 = vunpack.c.l.b16 %v679
        %v940 = vunpack.c.l.b16 %v680
        %v941 = vunpack.c.l.b16 %v681
        %v942 = vunpack.c.l.b16 %v682
        %v943 = vunpack.c.l.b16 %v683
        %v944 = vunpack.c.l.b16 %v684
        %v945 = vunpack.c.l.b16 %v685
        %v946 = vunpack.c.l.b16 %v686
        %v947 = vunpack.c.l.b16 %v687
        %v948 = vunpack.c.l.b16 %v688
        %v949 = vunpack.c.l.b16 %v689
        %v950 = vunpack.c.l.b16 %v690
        %v951 = vunpack.c.l.b16 %v691
        %v952 = vunpack.c.l.b16 %v692
        %v953 = vunpack.c.l.b16 %v693
        %v954 = vunpack.c.l.b16 %v694
        %v955 = vunpack.c.l.b16 %v695
        %v956 = vunpack.c.l.b16 %v696
        %v957 = vunpack.c.l.b16 %v697
        %v958 = vunpack.c.l.b16 %v698
        %v959 = vunpack.c.l.b16 %v699
        %v960 = vunpack.c.l.b16 %v700
        %v961 = vunpack.c.l.b16 %v701
        %v962 = vunpack.c.l.b16 %v702
        %v963 = vunpack.c.l.b16 %v703
        %v964 = vunpack.c.l.b16 %v704
        %v965 = vunpack.c.l.b16 %v705
        %v966 = vunpack.c.l.b16 %v706
        %v967 = vunpack.c.l.b16 %v707
        %v968 = vunpack.c.l.b16 %v708
        %v969 = vunpack.c.l.b16 %v709
        %v970 = vunpack.c.l.b16 %v710
        %v971 = vunpack.c.l.b16 %v711
        %v972 = vunpack.c.l.b16 %v712
        %v973 = vunpack.c.l.b16 %v713
        %v974 = vunpack.c.l.b16 %v714
        %v975 = vunpack.c.l.b16 %v715
        %v976 = vunpack.c.l.b16 %v716
        %v977 = vunpack.c.l.b16 %v717
        %v978 = vunpack.c.l.b16 %v718
        %v979 = vunpack.c.l.b16 %v719
        %v980 = vunpack.c.l.b16 %v720
        %v981 = vunpack.c.l.b16 %v721
        %v982 = vunpack.c.l.b16 %v722
        %v983 = vunpack.c.l.b16 %v723
        %v984 = vunpack.c.l.b16 %v724
        %v985 = vunpack.c.l.b16 %v725
        %v986 = vunpack.c.l.b16 %v726
        %v987 = vunpack.c.l.b16 %v727
        %v988 = vunpack.c.l.b16 %v728
        %v989 = vunpack.c.l.b16 %v729
        %v990 = vunpack.c.l.b16 %v730
        %v991 = vunpack.c.l.b16 %v731
        %v992 = vunpack.c.l.b16 %v732
        %v993 = vunpack.c.l.b16 %v733
        %v994 = vunpack.c.l.b16 %v734
        %v995 = vunpack.c.l.b16 %v735
        %v996 = vunpack.c.l.b16 %v736
        %v997 = vunpack.c.l.b16 %v737
        %v998 = vunpack.c.l.b16 %v738
        %v999 = vunpack.c.l.b16 %v739
        %v1000 = vunpack.c.l.b16 %v740
        %v1001 = vunpack.c.l.b16 %v741
        %v1002 = vunpack.c.l.b16 %v742
        %v1003 = vunpack.c.l.b16 %v743
        %v1004 = vunpack.c.l.b16 %v744
        %v1005 = vunpack.c.l.b16 %v745
        %v1006 = vunpack.c.l.b16 %v746
        %v1007 = vunpack.c.l.b16 %v747
        %v1008 = vunpack.c.l.b16 %v748
        %v1009 = vunpack.c.l.b16 %v749
        %v1010 = vunpack.c.l.b16 %v750
        %v1011 = vunpack.c.l.b16 %v751
        %v1012 = vunpack.c.l.b16 %v752
        %v1013 = vunpack.c.l.b16 %v753
        %v1014 = vunpack.c.l.b16 %v754
        %v1015 = vunpack.c.l.b16 %v755
        %v1016 = vunpack.c.l.b16 %v756
        %v1017 = vunpack.c.l.b16 %v757
        %v1018 = vunpack.c.l.b16 %v758
        %v1019 = vunpack.c.l.b16 %v759
        %v1020 = vunpack.c.l.b16 %v760
        %v1021 = vunpack.c.l.b16 %v761
        %v1022 = vunpack.c.l.b16 %v762
        %v1023 = vunpack.c.l.b16 %v763
        %v1024 = vunpack.c.l.b16 %v764
        %v1025 = vunpack.c.l.b16 %v765
        %v1026 = vunpack.c.l.b16 %v766
        %v1027 = vunpack.c.l.b16 %v767
        %v1028 = vunpack.c.l.b16 %v768
        %v1029 = vunpack.c.l.b16 %v769
        %v1030 = vunpack.c.l.b16 %v770
        %v1031 = vpack.c.b16 %v904, %v903
        %v1032 = vpack.c.b16 %v906, %v905
        %v1033 = vpack.c.b16 %v908, %v907
        %v1034 = vpack.c.b16 %v910, %v909
        %v1035 = vpack.c.b16 %v912, %v911
        %v1036 = vpack.c.b16 %v914, %v913
        %v1037 = vpack.c.b16 %v916, %v915
        %v1038 = vpack.c.b16 %v918, %v917
        %v1039 = vpack.c.b16 %v920, %v919
        %v1040 = vpack.c.b16 %v922, %v921
        %v1041 = vpack.c.b16 %v924, %v923
        %v1042 = vpack.c.b16 %v926, %v925
        %v1043 = vpack.c.b16 %v928, %v927
        %v1044 = vpack.c.b16 %v930, %v929
        %v1045 = vpack.c.b16 %v932, %v931
        %v1046 = vpack.c.b16 %v934, %v933
        %v1047 = vpack.c.b16 %v936, %v935
        %v1048 = vpack.c.b16 %v938, %v937
        %v1049 = vpack.c.b16 %v940, %v939
        %v1050 = vpack.c.b16 %v942, %v941
        %v1051 = vpack.c.b16 %v944, %v943
        %v1052 = vpack.c.b16 %v946, %v945
        %v1053 = vpack.c.b16 %v948, %v947
        %v1054 = vpack.c.b16 %v950, %v949
        %v1055 = vpack.c.b16 %v952, %v951
        %v1056 = vpack.c.b16 %v954, %v953
        %v1057 = vpack.c.b16 %v956, %v955
        %v1058 = vpack.c.b16 %v958, %v957
        %v1059 = vpack.c.b16 %v960, %v959
        %v1060 = vpack.c.b16 %v962, %v961
        %v1061 = vpack.c.b16 %v964, %v963
        %v1062 = vpack.c.b16 %v966, %v965
        %v1063 = vpack.c.b16 %v968, %v967
        %v1064 = vpack.c.b16 %v970, %v969
        %v1065 = vpack.c.b16 %v972, %v971
        %v1066 = vpack.c.b16 %v974, %v973
        %v1067 = vpack.c.b16 %v976, %v975
        %v1068 = vpack.c.b16 %v978, %v977
        %v1069 = vpack.c.b16 %v980, %v979
        %v1070 = vpack.c.b16 %v982, %v981
        %v1071 = vpack.c.b16 %v984, %v983
        %v1072 = vpack.c.b16 %v986, %v985
        %v1073 = vpack.c.b16 %v988, %v987
        %v1074 = vpack.c.b16 %v990, %v989
        %v1075 = vpack.c.b16 %v992, %v991
        %v1076 = vpack.c.b16 %v994, %v993
        %v1077 = vpack.c.b16 %v996, %v995
        %v1078 = vpack.c.b16 %v998, %v997
        %v1079 = vpack.c.b16 %v1000, %v999
        %v1080 = vpack.c.b16 %v1002, %v1001
        %v1081 = vpack.c.b16 %v1004, %v1003
        %v1082 = vpack.c.b16 %v1006, %v1005
        %v1083 = vpack.c.b16 %v1008, %v1007
        %v1084 = vpack.c.b16 %v1010, %v1009
        %v1085 = vpack.c.b16 %v1012, %v1011
        %v1086 = vpack.c.b16 %v1014, %v1013
        %v1087 = vpack.c.b16 %v1016, %v1015
        %v1088 = vpack.c.b16 %v1018, %v1017
        %v1089 = vpack.c.b16 %v1020, %v1019
        %v1090 = vpack.c.b16 %v1022, %v1021
        %v1091 = vpack.c.b16 %v1024, %v1023
        %v1092 = vpack.c.b16 %v1026, %v1025
        %v1093 = vpack.c.b16 %v1028, %v1027
        %v1094 = vpack.c.b16 %v1030, %v1029
        %1159 = vmatpush.bf16.msra.mxu0 %v1038
        %1160 = vmatpush.bf16.msra.mxu0 %v1037
        %1161 = vmatpush.bf16.msra.mxu0 %v1036
        %1162 = vmatpush.bf16.msra.mxu0 %v1035
        %1163 = vmatpush.bf16.msra.mxu0 %v1034
        %1164 = vmatpush.bf16.msra.mxu0 %v1033
        %1165 = vmatpush.bf16.msra.mxu0 %v1032
        %1166 = vmatpush.bf16.msra.mxu0 %v1031
        %1167 = vmatmul.bf16.gmra.mxu0 %v635
        %v1168 = vpop.f32.mrf.mxu0
        %v1169 = vadd.f32 %v773, %v1168
        %v1170 = vpop.f32.mrf.mxu0
        %1171 = vdwg.mxu0
        %1172 = vmatpush.bf16.msra.mxu0 %v1046
        %1173 = vmatpush.bf16.msra.mxu0 %v1045
        %1174 = vmatpush.bf16.msra.mxu0 %v1044
        %1175 = vmatpush.bf16.msra.mxu0 %v1043
        %1176 = vmatpush.bf16.msra.mxu0 %v1042
        %1177 = vmatpush.bf16.msra.mxu0 %v1041
        %1178 = vmatpush.bf16.msra.mxu0 %v1040
        %1179 = vmatpush.bf16.msra.mxu0 %v1039
        %1180 = vmatmul.bf16.gmra.mxu0 %v636
        %v1181 = vpop.f32.mrf.mxu0
        %v1182 = vadd.f32 %v1169, %v1181
        %v1183 = vpop.f32.mrf.mxu0
        %1184 = vdwg.mxu0
        %1185 = vmatpush.bf16.msra.mxu0 %v1054
        %1186 = vmatpush.bf16.msra.mxu0 %v1053
        %1187 = vmatpush.bf16.msra.mxu0 %v1052
        %1188 = vmatpush.bf16.msra.mxu0 %v1051
        %1189 = vmatpush.bf16.msra.mxu0 %v1050
        %1190 = vmatpush.bf16.msra.mxu0 %v1049
        %1191 = vmatpush.bf16.msra.mxu0 %v1048
        %1192 = vmatpush.bf16.msra.mxu0 %v1047
        %1193 = vmatmul.bf16.gmra.mxu0 %v637
        %v1194 = vpop.f32.mrf.mxu0
        %v1195 = vadd.f32 %v1182, %v1194
        %v1196 = vpop.f32.mrf.mxu0
        %1197 = vdwg.mxu0
        %1198 = vmatpush.bf16.msra.mxu0 %v1062
        %1199 = vmatpush.bf16.msra.mxu0 %v1061
        %1200 = vmatpush.bf16.msra.mxu0 %v1060
        %1201 = vmatpush.bf16.msra.mxu0 %v1059
        %1202 = vmatpush.bf16.msra.mxu0 %v1058
        %1203 = vmatpush.bf16.msra.mxu0 %v1057
        %1204 = vmatpush.bf16.msra.mxu0 %v1056
        %1205 = vmatpush.bf16.msra.mxu0 %v1055
        %1206 = vmatmul.bf16.gmra.mxu0 %v638
        %v1207 = vpop.f32.mrf.mxu0
        %v1208 = vadd.f32 %v1195, %v1207
        %v1209 = vpop.f32.mrf.mxu0
        %1210 = vdwg.mxu0
        %1211 = vmatpush.bf16.msra.mxu0 %v1070
        %1212 = vmatpush.bf16.msra.mxu0 %v1069
        %1213 = vmatpush.bf16.msra.mxu0 %v1068
        %1214 = vmatpush.bf16.msra.mxu0 %v1067
        %1215 = vmatpush.bf16.msra.mxu0 %v1066
        %1216 = vmatpush.bf16.msra.mxu0 %v1065
        %1217 = vmatpush.bf16.msra.mxu0 %v1064
        %1218 = vmatpush.bf16.msra.mxu0 %v1063
        %1219 = vmatmul.bf16.gmra.mxu0 %v639
        %v1220 = vpop.f32.mrf.mxu0
        %v1221 = vadd.f32 %v1208, %v1220
        %v1222 = vpop.f32.mrf.mxu0
        %1223 = vdwg.mxu0
        %1224 = vmatpush.bf16.msra.mxu0 %v1078
        %1225 = vmatpush.bf16.msra.mxu0 %v1077
        %1226 = vmatpush.bf16.msra.mxu0 %v1076
        %1227 = vmatpush.bf16.msra.mxu0 %v1075
        %1228 = vmatpush.bf16.msra.mxu0 %v1074
        %1229 = vmatpush.bf16.msra.mxu0 %v1073
        %1230 = vmatpush.bf16.msra.mxu0 %v1072
        %1231 = vmatpush.bf16.msra.mxu0 %v1071
        %1232 = vmatmul.bf16.gmra.mxu0 %v640
        %v1233 = vpop.f32.mrf.mxu0
        %v1234 = vadd.f32 %v1221, %v1233
        %v1235 = vpop.f32.mrf.mxu0
        %1236 = vdwg.mxu0
        %1237 = vmatpush.bf16.msra.mxu0 %v1086
        %1238 = vmatpush.bf16.msra.mxu0 %v1085
        %1239 = vmatpush.bf16.msra.mxu0 %v1084
        %1240 = vmatpush.bf16.msra.mxu0 %v1083
        %1241 = vmatpush.bf16.msra.mxu0 %v1082
        %1242 = vmatpush.bf16.msra.mxu0 %v1081
        %1243 = vmatpush.bf16.msra.mxu0 %v1080
        %1244 = vmatpush.bf16.msra.mxu0 %v1079
        %1245 = vmatmul.bf16.gmra.mxu0 %v641
        %v1246 = vpop.f32.mrf.mxu0
        %v1247 = vadd.f32 %v1234, %v1246
        %v1248 = vpop.f32.mrf.mxu0
        %1249 = vdwg.mxu0
        %1250 = vmatpush.bf16.msra.mxu0 %v1094
        %1251 = vmatpush.bf16.msra.mxu0 %v1093
        %1252 = vmatpush.bf16.msra.mxu0 %v1092
        %1253 = vmatpush.bf16.msra.mxu0 %v1091
        %1254 = vmatpush.bf16.msra.mxu0 %v1090
        %1255 = vmatpush.bf16.msra.mxu0 %v1089
        %1256 = vmatpush.bf16.msra.mxu0 %v1088
        %1257 = vmatpush.bf16.msra.mxu0 %v1087
        %1258 = vmatmul.bf16.gmra.mxu0 %v642
        %v1259 = vpop.f32.mrf.mxu0
        %v1260 = vadd.f32 %v1247, %v1259
        %v1261 = vpop.f32.mrf.mxu0
        %1262 = vdwg.mxu0
        %vm1263 = vcmp.ge.f32.partialorder %v1260, 0.0
        %v1264 = vmul.f32 %v1260, 0.01
        %v1265 = vsel %vm1263, %v1260, %v1264
        %v1266 = vpack.c.bf16 %v1265, %v1265
        %1267 = vst [vmem:[%s289] sm:$0xf] %v1266
        %s1268 = sand.u32 %s142, 1
        %s1269 = scalar_lea.sflag [#allocation4], %s1268
        %s1270 = sand.u32 %s142, 1
        %s1271 = smul.addr %s1270, 4
        %s1272 = scalar_lea.vmem [#allocation10], %s1271
        // Predicated region
        $region57: #{_regression_padded.1} parent=39 // pred_check
          %p1273 = pneg %p152
        $region58: #{_regression_padded.1} parent=39 // pred_check_branch
          %1275 = sbr.rel (%p1273) target = $region60
        $region59: #{_regression_padded.1} parent=39 // pred_region
          %1277 = vsyncadd %s1269, 0
          %s1278 = smul.addr %s24, 4
          %s1279 = scalar_lea.hbm %s5, %s1278
          %s1281 = sshll.u32 %s1272, 4
          %s1282 = int_to_ptr.vmem [resolvable:$true] %s1281
          %s1283 = sshll.u32 %s1279, 4
          %s1284 = int_to_ptr.hbm [resolvable:$true] %s1283
          %1286 = dma.vmem_to_hbm [thread:$0]  %s1282, 64, %s1284, %s1269
        $region60: #{_regression_padded.1} parent=39 // pred_fallthru
          _
      $region40: #{_regression_padded.1} parent=5 // pred_fallthru
        _
      %p1287 = scmp.le.s32.totalorder 2, %s19
      // Predicated region
      $region61: #{_regression_padded.1} parent=5 // pred_check
        %p1288 = pneg %p1287
      $region62: #{_regression_padded.1} parent=5 // pred_check_branch
        %1290 = sbr.rel (%p1288) target = $region64
      $region63: #{_regression_padded.1} parent=5 // pred_region
        %s1291 = ssub.s32 %s19, 2
        // Predicated region
        $region65: #{_regression_padded.1} parent=63 // pred_check
          %p1292 = pneg %p158
        $region66: #{_regression_padded.1} parent=63 // pred_check_branch
          %1294 = sbr.rel (%p1292) target = $region68
        $region67: #{_regression_padded.1} parent=63 // pred_region
          %s1295 = sand.u32 %s143, 1
          %s1296 = scalar_lea.sflag [#allocation4], %s1295
          %s1297 = sand.u32 %s143, 1
          %s1298 = smul.addr %s1297, 4
          %s1299 = scalar_lea.vmem [#allocation10], %s1298
          %1301 = dma.done %s1296, 64
        $region68: #{_regression_padded.1} parent=63 // pred_fallthru
          _
      $region64: #{_regression_padded.1} parent=5 // pred_fallthru
        _
    $region6: #{_regression_padded.1} parent=1 // loop_footer
      %s23 = sadd.s32 1, %s19
    $region7: #{_regression_padded.1} parent=1 // loop_footer_branch
      %18 = sbr.rel target = $region3
    $region8: #{_regression_padded.1} parent=1 // loop_exit
      _
    %1302 = vsyncpa [#allocation3], 1
    %s1303 = scalar_lea.sflag [#allocation3], 1
    %1304 = vsyncpa %s1303, 1
    %1305 = vsyncpa [#allocation6], 1
    %1306 = vsyncpa [#allocation9], 1
    %1307 = vsyncpa [#allocation4], 1
    %s1308 = scalar_lea.sflag [#allocation4], 1
    %1309 = vsyncpa %s1308, 1

</llo_original>
